<compile_context>
chip_gen: v6e
topology: v6e:2x2x1
jax: 0.10.0
libtpu: 0.0.40
codegen_flags: <defaults>
</compile_context>

<pallas_src>
import functools
import math

import jax
import jax.numpy as jnp
from jax.experimental import pallas as pl
from jax.experimental.pallas import tpu as pltpu


# -----------------------------------------------------------------------------
# Tiling heuristic.
# -----------------------------------------------------------------------------
def _choose_tiling(c, s, b, itemsize):
    """Returns (ts, g_s, s_pad): spatial tile, tiles per batch, padded spatial size."""
    c8 = -(-c // 8) * 8  # sublane-padded class count for f32 temporaries

    def footprint(ts):
        # 2x double-buffered input tile + ~4 (C,ts)-sized f32 temporaries
        # (upcast copy, shifted, exp, select) + double-buffered target/nll rows
        # (each padded to 8 sublanes in VMEM).
        return 2 * c8 * ts * itemsize + 4 * c8 * ts * 4 + 4 * 8 * ts * 4

    cap = 32768
    while cap > 128 and footprint(cap) > (12 << 20):
        cap //= 2

    # Candidate tiles: multiples of 128 that divide s (descending), plus s itself
    # when it fits (a full-dim block is always a legal BlockSpec).
    cands = [128 * m for m in range(min(cap, s) // 128, 0, -1) if s % (128 * m) == 0]
    if s <= cap and s not in cands:
        cands.insert(0, s)
    if not cands:
        # s > cap with no usable divisor: pad fallback (one HBM copy of pred).
        ts = cap
        s_pad = -(-s // ts) * ts
        return ts, s_pad // ts, s_pad

    ts = cands[0]
    for d in cands:  # largest tile that still gives >= 8 grid steps, if any
        if d >= 512 and b * (s // d) >= 8:
            ts = d
            break
    return ts, s // ts, s


# -----------------------------------------------------------------------------
# Kernel 1: per-pixel masked NLL (classes on sublanes, pixels on lanes).
#   logits block : (1, C, TS)      target block : (1, 1, TS) int32
#   output       : (1, 1, TS) f32  = -log softmax[target], or -1.0 sentinel.
# -----------------------------------------------------------------------------
def _make_stats_kernel(ignore_label: int):
    def stats_kernel(logits_ref, tgt_ref, nll_ref):
        logits = logits_ref[...].astype(jnp.float32)            # (1, C, TS)
        tgt = tgt_ref[...]                                       # (1, 1, TS)
        valid = tgt != ignore_label
        safe_t = jnp.where(valid, tgt, 0)

        _, c, ts = logits.shape
        m = jnp.max(logits, axis=1, keepdims=True)               # (1, 1, TS)
        shifted = logits - m                                     # (1, C, TS)
        sum_e = jnp.sum(jnp.exp(shifted), axis=1, keepdims=True)  # (1, 1, TS)

        cls = jax.lax.broadcasted_iota(jnp.int32, (1, c, ts), 1)
        shifted_t = jnp.sum(jnp.where(cls == safe_t, shifted, 0.0),
                            axis=1, keepdims=True)               # logit_t - m
        nll = jnp.log(sum_e) - shifted_t                         # -log softmax[t] >= 0

        # invalid (and padded) pixels -> sentinel -1; valid nll is always >= 0.
        nll_ref[...] = jnp.where(valid, nll, -1.0)

    return stats_kernel


def _stats_call(logits3, tgt3, ignore_label, ts):
    b, c, s_pad = logits3.shape
    g_s = s_pad // ts
    row_spec = pl.BlockSpec((1, 1, ts), lambda bi, si: (bi, 0, si))
    bytes_acc = (logits3.size * logits3.dtype.itemsize
                 + tgt3.size * 4 + b * s_pad * 4)
    return pl.pallas_call(
        _make_stats_kernel(ignore_label),
        out_shape=jax.ShapeDtypeStruct((b, 1, s_pad), jnp.float32),
        grid_spec=pltpu.PrefetchScalarGridSpec(
            num_scalar_prefetch=0,
            grid=(b, g_s),
            in_specs=[
                pl.BlockSpec((1, c, ts), lambda bi, si: (bi, 0, si)),
                row_spec,
            ],
            out_specs=row_spec,
        ),
        compiler_params=pltpu.CompilerParams(
            dimension_semantics=("parallel", "parallel")),
        cost_estimate=pl.CostEstimate(
            flops=8 * b * c * s_pad,
            transcendentals=b * s_pad * (c + 1),
            bytes_accessed=bytes_acc),
    )(logits3, tgt3)


# -----------------------------------------------------------------------------
# Kernel 2: single-pass OHEM reduction.  Reads nll once; per tile writes one
# (1,1,8,128) block whose lanes 0..3 of sublane 0 hold:
#   [ sum(nll | kept), count(kept), sum(nll | valid), count(valid) ]
# kept = nll >= thr (thr >= 0), valid = nll >= 0 (sentinel -1 excluded from both).
# -----------------------------------------------------------------------------
def _reduce_kernel(thr_ref, nll_ref, out_ref):
    thr = thr_ref[0]                                             # f32 scalar (SMEM)
    nll = nll_ref[...]                                           # (1, 1, TS) f32
    validf = (nll >= 0.0).astype(jnp.float32)
    keptf = (nll >= thr).astype(jnp.float32)

    kept_sum = jnp.sum(nll * keptf)
    kept_cnt = jnp.sum(keptf)
    valid_sum = jnp.sum(nll * validf)
    valid_cnt = jnp.sum(validf)

    ii = jax.lax.broadcasted_iota(jnp.int32, (1, 1, 8, 128), 2)
    jj = jax.lax.broadcasted_iota(jnp.int32, (1, 1, 8, 128), 3)
    row0 = ii == 0
    out = jnp.where(row0 & (jj == 0), kept_sum,
          jnp.where(row0 & (jj == 1), kept_cnt,
          jnp.where(row0 & (jj == 2), valid_sum,
          jnp.where(row0 & (jj == 3), valid_cnt, 0.0))))
    out_ref[...] = out


def _ohem_reduce(nll, threshold, ts):
    b, _, s_pad = nll.shape
    g_s = s_pad // ts
    thr_arr = jnp.asarray(threshold, dtype=jnp.float32).reshape((1,))
    out = pl.pallas_call(
        _reduce_kernel,
        out_shape=jax.ShapeDtypeStruct((b, g_s, 8, 128), jnp.float32),
        grid_spec=pltpu.PrefetchScalarGridSpec(
            num_scalar_prefetch=1,
            grid=(b, g_s),
            in_specs=[pl.BlockSpec((1, 1, ts), lambda bi, si, thr: (bi, 0, si))],
            out_specs=pl.BlockSpec((1, 1, 8, 128),
                                   lambda bi, si, thr: (bi, si, 0, 0)),
        ),
        compiler_params=pltpu.CompilerParams(
            dimension_semantics=("parallel", "parallel")),
        cost_estimate=pl.CostEstimate(
            flops=8 * b * s_pad,
            transcendentals=0,
            bytes_accessed=b * s_pad * 4 + b * g_s * 8 * 128 * 4 + 4),
    )(thr_arr, nll)
    return jnp.sum(out, axis=(0, 1, 2))            # (128,) -> lanes 0..3 carry totals


# -----------------------------------------------------------------------------
# Wrapper: full ProbOhemCrossEntropy2d forward.
# -----------------------------------------------------------------------------
@functools.partial(jax.jit, static_argnames=("ignore_label", "thresh", "min_kept"))
def prob_ohem_cross_entropy(pred, target, *, ignore_label, thresh=0.6, min_kept=256):
    b, c, d, h, w = pred.shape
    s = d * h * w
    n_real = b * s

    ts, g_s, s_pad = _choose_tiling(c, s, b, pred.dtype.itemsize)

    # NCDHW -> (b, C, S): a free view, no transpose.  Original dtype kept in HBM;
    # kernel 1 upcasts to f32 internally.
    logits3 = pred.reshape(b, c, s)
    tgt3 = target.reshape(b, 1, s).astype(jnp.int32)
    if s_pad != s:
        # Rare fallback only (see TODO at top); padded pixels get the ignore label
        # so they become sentinels and never affect threshold, counts, or the loss.
        logits3 = jnp.pad(logits3, ((0, 0), (0, 0), (0, s_pad - s)))
        tgt3 = jnp.pad(tgt3, ((0, 0), (0, 0), (0, s_pad - s)),
                       constant_values=ignore_label)

    nll = _stats_call(logits3, tgt3, ignore_label, ts)     # (b, 1, s_pad) f32

    if min_kept > 0:
        # k-th largest masked nll == -log(k-th smallest masked prob).
        k = min(min_kept, n_real)
        nll_flat = nll.reshape(-1)
        rows = b * g_s
        if rows > 1 and ts >= k:
            # Hierarchical selection: per-tile top-k then top-k over candidates.
            cand = jax.lax.top_k(nll_flat.reshape(rows, ts), k)[0].reshape(-1)
            kth_nll = jax.lax.top_k(cand, k)[0][k - 1]
        else:
            kth_nll = jax.lax.top_k(nll_flat, k)[0][k - 1]
        # threshold_prob = max(kth_prob, thresh)  <=>  nll_thr = min(kth_nll, -log(thresh));
        # clamped to 0 so sentinels (-1) are never kept (valid nll is always >= 0).
        nl_thresh = -math.log(thresh) if thresh > 0.0 else math.inf
        thr = jnp.maximum(jnp.minimum(kth_nll, jnp.float32(nl_thresh)),
                          jnp.float32(0.0))
    else:
        thr = jnp.float32(0.0)                               # kept == all valid

    totals = _ohem_reduce(nll, thr, ts)
    kept_sum, kept_cnt = totals[0], totals[1]
    valid_sum, valid_cnt = totals[2], totals[3]

    if min_kept > 0:
        # PyTorch: `if min_kept > num_valid:` only prints -> keep every valid pixel.
        use_all_valid = jnp.float32(min_kept) > valid_cnt
        loss_sum = jnp.where(use_all_valid, valid_sum, kept_sum)
        denom = jnp.where(use_all_valid, valid_cnt, kept_cnt)
    else:
        # min_kept == 0: PyTorch applies no kept mask at all.
        loss_sum, denom = valid_sum, valid_cnt

    # CrossEntropyLoss(reduction='mean', ignore_index=...): mean over kept pixels.
    # If nothing is kept this yields 0/0 = nan, matching PyTorch.
    return loss_sum / denom


# -----------------------------------------------------------------------------
# Pure-JAX reference (mirrors the PyTorch forward) for a correctness check.
# -----------------------------------------------------------------------------
def _ref_loss(pred, target, ignore_label, thresh, min_kept):
    b, c, d, h, w = pred.shape
    logits = jnp.transpose(pred, (0, 2, 3, 4, 1)).reshape(-1, c).astype(jnp.float32)
    tgt = target.reshape(-1).astype(jnp.int32)
    valid = tgt != ignore_label
    safe_t = jnp.where(valid, tgt, 0)
    logp = jax.nn.log_softmax(logits, axis=-1)
    logp_t = jnp.take_along_axis(logp, safe_t[:, None], axis=-1)[:, 0]
    prob_t = jnp.exp(logp_t)
    masked_prob = jnp.where(valid, prob_t, 1.0)
    num_valid = jnp.sum(valid)
    if min_kept > 0:
        sorted_p = jnp.sort(masked_prob)
        kth = sorted_p[min(masked_prob.shape[0], min_kept) - 1]
        threshold = jnp.where(kth > thresh, kth, jnp.float32(thresh))
        threshold = jnp.where(min_kept > num_valid, jnp.float32(2.0), threshold)
    else:
        threshold = jnp.float32(2.0)
    kept = valid & (masked_prob <= threshold)
    nll = -logp_t
    return jnp.sum(nll * kept) / jnp.sum(kept)


if __name__ == "__main__":
    key = jax.random.PRNGKey(0)
    b, c, d, h, w = 2, 5, 4, 8, 8          # N = b*d*h*w = 512
    ignore_label = 255
    thresh = 0.6
    min_kept = 256

    k1, k2, k3 = jax.random.split(key, 3)
    pred = jax.random.normal(k1, (b, c, d, h, w), dtype=jnp.float32)
    tgt = jax.random.randint(k2, (b, d, h, w), 0, c)
    drop = jax.random.bernoulli(k3, 0.1, (b, d, h, w))
    tgt = jnp.where(drop, ignore_label, tgt).astype(jnp.int32)

    loss = prob_ohem_cross_entropy(
        pred, tgt, ignore_label=ignore_label, thresh=thresh, min_kept=min_kept
    )
    loss = jax.block_until_ready(loss)

    ref = _ref_loss(pred, tgt, ignore_label, thresh, min_kept)
    assert jnp.allclose(loss, ref, rtol=1e-3, atol=1e-3), (float(loss), float(ref))

    print("KERNEL_OK")
</pallas_src>

<mosaic_0001>
module attributes {stable_mosaic.version = 11 : i64} {
  func.func @stats_kernel(%arg0: i32, %arg1: i32, %arg2: memref<1x5x256xf32, #tpu.memory_space<vmem>>, %arg3: memref<1x1x256xi32, #tpu.memory_space<vmem>>, %arg4: memref<1x1x256xf32, #tpu.memory_space<vmem>>) attributes {dimension_semantics = [#tpu.dimension_semantics<parallel>, #tpu.dimension_semantics<parallel>], iteration_bounds = array<i64: 2, 1>, scalar_prefetch = 0 : i64, scratch_operands = 0 : i64, tpu.core_type = #tpu.core_type<tc>, window_params = [{transform_indices = @transform_0, window_bounds = array<i64: 1, 5, 256>}, {transform_indices = @transform_1, window_bounds = array<i64: 1, 1, 256>}, {transform_indices = @transform_2, window_bounds = array<i64: 1, 1, 256>}]} {
    %c0 = arith.constant 0 : index
    %c0_0 = arith.constant 0 : index
    %c0_1 = arith.constant 0 : index
    %0 = vector.load %arg2[%c0, %c0_0, %c0_1] : memref<1x5x256xf32, #tpu.memory_space<vmem>>, vector<1x5x256xf32>
    %c0_2 = arith.constant 0 : index
    %c0_3 = arith.constant 0 : index
    %c0_4 = arith.constant 0 : index
    %1 = vector.load %arg3[%c0_2, %c0_3, %c0_4] : memref<1x1x256xi32, #tpu.memory_space<vmem>>, vector<1x1x256xi32>
    %c255_i32 = arith.constant 255 : i32
    %2 = vector.broadcast %c255_i32 : i32 to vector<1x1x256xi32>
    %3 = arith.cmpi ne, %1, %2 : vector<1x1x256xi32>
    %c0_i32 = arith.constant 0 : i32
    %4 = vector.broadcast %c0_i32 : i32 to vector<1x1x256xi32>
    %5 = arith.select %3, %1, %4 : vector<1x1x256xi1>, vector<1x1x256xi32>
    %cst = arith.constant dense<0xFF800000> : vector<1x256xf32>
    %6 = vector.multi_reduction <maximumf>, %0, %cst [1] : vector<1x5x256xf32> to vector<1x256xf32>
    %7 = vector.shape_cast %6 : vector<1x256xf32> to vector<1x1x256xf32>
    %8 = vector.broadcast %7 : vector<1x1x256xf32> to vector<1x5x256xf32>
    %9 = arith.subf %0, %8 : vector<1x5x256xf32>
    %10 = math.exp %9 : vector<1x5x256xf32>
    %cst_5 = arith.constant dense<0.000000e+00> : vector<1x256xf32>
    %11 = vector.multi_reduction <add>, %10, %cst_5 [1] : vector<1x5x256xf32> to vector<1x256xf32>
    %12 = vector.shape_cast %11 : vector<1x256xf32> to vector<1x1x256xf32>
    %13 = tpu.iota {dimensions = array<i32: 1>} : vector<1x5x256xi32>
    %14 = vector.broadcast %5 : vector<1x1x256xi32> to vector<1x5x256xi32>
    %15 = arith.cmpi eq, %13, %14 : vector<1x5x256xi32>
    %cst_6 = arith.constant 0.000000e+00 : f32
    %16 = vector.broadcast %cst_6 : f32 to vector<1x5x256xf32>
    %17 = arith.select %15, %9, %16 : vector<1x5x256xi1>, vector<1x5x256xf32>
    %cst_7 = arith.constant dense<0.000000e+00> : vector<1x256xf32>
    %18 = vector.multi_reduction <add>, %17, %cst_7 [1] : vector<1x5x256xf32> to vector<1x256xf32>
    %19 = vector.shape_cast %18 : vector<1x256xf32> to vector<1x1x256xf32>
    %20 = math.log %12 : vector<1x1x256xf32>
    %21 = arith.subf %20, %19 : vector<1x1x256xf32>
    %cst_8 = arith.constant -1.000000e+00 : f32
    %22 = vector.broadcast %cst_8 : f32 to vector<1x1x256xf32>
    %23 = arith.select %3, %21, %22 : vector<1x1x256xi1>, vector<1x1x256xf32>
    %c0_9 = arith.constant 0 : index
    %c0_10 = arith.constant 0 : index
    %c0_11 = arith.constant 0 : index
    %24 = vector.load %arg4[%c0_9, %c0_10, %c0_11] : memref<1x1x256xf32, #tpu.memory_space<vmem>>, vector<1x1x256xf32>
    tpu.vector_store %arg4[%c0_9, %c0_10, %c0_11], %23 {strides = array<i32>} : memref<1x1x256xf32, #tpu.memory_space<vmem>>, vector<1x1x256xf32>,
    return
  }
  func.func @transform_0(%arg0: i32, %arg1: i32) -> (i32, i32, i32) {
    %c0_i32 = arith.constant 0 : i32
    %c0_i32_0 = arith.constant 0 : i32
    return %arg0, %c0_i32, %arg1 : i32, i32, i32
  }
  func.func @transform_1(%arg0: i32, %arg1: i32) -> (i32, i32, i32) {
    %c0_i32 = arith.constant 0 : i32
    %c0_i32_0 = arith.constant 0 : i32
    return %arg0, %c0_i32, %arg1 : i32, i32, i32
  }
  func.func @transform_2(%arg0: i32, %arg1: i32) -> (i32, i32, i32) {
    %c0_i32 = arith.constant 0 : i32
    %c0_i32_0 = arith.constant 0 : i32
    return %arg0, %c0_i32, %arg1 : i32, i32, i32
  }
}

module attributes {stable_mosaic.version = 11 : i64} {
  func.func @_reduce_kernel(%arg0: i32, %arg1: i32, %arg2: memref<1xf32, #tpu.memory_space<smem>>, %arg3: memref<1x1x256xf32, #tpu.memory_space<vmem>>, %arg4: memref<1x1x8x128xf32, #tpu.memory_space<vmem>>) attributes {dimension_semantics = [#tpu.dimension_semantics<parallel>, #tpu.dimension_semantics<parallel>], iteration_bounds = array<i64: 2, 1>, scalar_prefetch = 1 : i64, scratch_operands = 0 : i64, tpu.core_type = #tpu.core_type<tc>, window_params = [{transform_indices = @transform_0, window_bounds = array<i64: 1, 1, 256>}, {transform_indices = @transform_1, window_bounds = array<i64: 1, 1, 8, 128>}]} {
    %c0 = arith.constant 0 : index
    %0 = memref.load %arg2[%c0] : memref<1xf32, #tpu.memory_space<smem>>
    %c0_0 = arith.constant 0 : index
    %c0_1 = arith.constant 0 : index
    %c0_2 = arith.constant 0 : index
    %1 = vector.load %arg3[%c0_0, %c0_1, %c0_2] : memref<1x1x256xf32, #tpu.memory_space<vmem>>, vector<1x1x256xf32>
    %cst = arith.constant 0.000000e+00 : f32
    %2 = vector.broadcast %cst : f32 to vector<1x1x256xf32>
    %3 = arith.cmpf oge, %1, %2 : vector<1x1x256xf32>
    %4 = arith.extui %3 : vector<1x1x256xi1> to vector<1x1x256xi32>
    %5 = arith.sitofp %4 : vector<1x1x256xi32> to vector<1x1x256xf32>
    %6 = vector.broadcast %0 : f32 to vector<1x1x256xf32>
    %7 = arith.cmpf oge, %1, %6 : vector<1x1x256xf32>
    %8 = arith.extui %7 : vector<1x1x256xi1> to vector<1x1x256xi32>
    %9 = arith.sitofp %8 : vector<1x1x256xi32> to vector<1x1x256xf32>
    %10 = arith.mulf %1, %9 : vector<1x1x256xf32>
    %11 = vector.shape_cast %10 : vector<1x1x256xf32> to vector<1x1x1x256xf32>
    %cst_3 = arith.constant dense<0.000000e+00> : vector<1xf32>
    %12 = vector.multi_reduction <add>, %11, %cst_3 [1, 2, 3] : vector<1x1x1x256xf32> to vector<1xf32>
    %13 = vector.shape_cast %12 : vector<1xf32> to vector<1x1x1x1xf32>
    %14 = vector.extract %13[0, 0, 0, 0] : f32 from vector<1x1x1x1xf32>
    %15 = vector.shape_cast %9 : vector<1x1x256xf32> to vector<1x1x1x256xf32>
    %cst_4 = arith.constant dense<0.000000e+00> : vector<1xf32>
    %16 = vector.multi_reduction <add>, %15, %cst_4 [1, 2, 3] : vector<1x1x1x256xf32> to vector<1xf32>
    %17 = vector.shape_cast %16 : vector<1xf32> to vector<1x1x1x1xf32>
    %18 = vector.extract %17[0, 0, 0, 0] : f32 from vector<1x1x1x1xf32>
    %19 = arith.mulf %1, %5 : vector<1x1x256xf32>
    %20 = vector.shape_cast %19 : vector<1x1x256xf32> to vector<1x1x1x256xf32>
    %cst_5 = arith.constant dense<0.000000e+00> : vector<1xf32>
    %21 = vector.multi_reduction <add>, %20, %cst_5 [1, 2, 3] : vector<1x1x1x256xf32> to vector<1xf32>
    %22 = vector.shape_cast %21 : vector<1xf32> to vector<1x1x1x1xf32>
    %23 = vector.extract %22[0, 0, 0, 0] : f32 from vector<1x1x1x1xf32>
    %24 = vector.shape_cast %5 : vector<1x1x256xf32> to vector<1x1x1x256xf32>
    %cst_6 = arith.constant dense<0.000000e+00> : vector<1xf32>
    %25 = vector.multi_reduction <add>, %24, %cst_6 [1, 2, 3] : vector<1x1x1x256xf32> to vector<1xf32>
    %26 = vector.shape_cast %25 : vector<1xf32> to vector<1x1x1x1xf32>
    %27 = vector.extract %26[0, 0, 0, 0] : f32 from vector<1x1x1x1xf32>
    %28 = tpu.iota {dimensions = array<i32: 2>} : vector<1x1x8x128xi32>
    %29 = tpu.iota {dimensions = array<i32: 3>} : vector<1x1x8x128xi32>
    %c0_i32 = arith.constant 0 : i32
    %30 = vector.broadcast %c0_i32 : i32 to vector<1x1x8x128xi32>
    %31 = arith.cmpi eq, %28, %30 : vector<1x1x8x128xi32>
    %c0_i32_7 = arith.constant 0 : i32
    %32 = vector.broadcast %c0_i32_7 : i32 to vector<1x1x8x128xi32>
    %33 = arith.cmpi eq, %29, %32 : vector<1x1x8x128xi32>
    %34 = arith.andi %31, %33 : vector<1x1x8x128xi1>
    %c1_i32 = arith.constant 1 : i32
    %35 = vector.broadcast %c1_i32 : i32 to vector<1x1x8x128xi32>
    %36 = arith.cmpi eq, %29, %35 : vector<1x1x8x128xi32>
    %37 = arith.andi %31, %36 : vector<1x1x8x128xi1>
    %c2_i32 = arith.constant 2 : i32
    %38 = vector.broadcast %c2_i32 : i32 to vector<1x1x8x128xi32>
    %39 = arith.cmpi eq, %29, %38 : vector<1x1x8x128xi32>
    %40 = arith.andi %31, %39 : vector<1x1x8x128xi1>
    %c3_i32 = arith.constant 3 : i32
    %41 = vector.broadcast %c3_i32 : i32 to vector<1x1x8x128xi32>
    %42 = arith.cmpi eq, %29, %41 : vector<1x1x8x128xi32>
    %43 = arith.andi %31, %42 : vector<1x1x8x128xi1>
    %cst_8 = arith.constant 0.000000e+00 : f32
    %44 = vector.broadcast %27 : f32 to vector<1x1x8x128xf32>
    %45 = vector.broadcast %cst_8 : f32 to vector<1x1x8x128xf32>
    %46 = arith.select %43, %44, %45 : vector<1x1x8x128xi1>, vector<1x1x8x128xf32>
    %47 = vector.broadcast %23 : f32 to vector<1x1x8x128xf32>
    %48 = arith.select %40, %47, %46 : vector<1x1x8x128xi1>, vector<1x1x8x128xf32>
    %49 = vector.broadcast %18 : f32 to vector<1x1x8x128xf32>
    %50 = arith.select %37, %49, %48 : vector<1x1x8x128xi1>, vector<1x1x8x128xf32>
    %51 = vector.broadcast %14 : f32 to vector<1x1x8x128xf32>
    %52 = arith.select %34, %51, %50 : vector<1x1x8x128xi1>, vector<1x1x8x128xf32>
    %c0_9 = arith.constant 0 : index
    %c0_10 = arith.constant 0 : index
    %c0_11 = arith.constant 0 : index
    %c0_12 = arith.constant 0 : index
    %53 = vector.load %arg4[%c0_9, %c0_10, %c0_11, %c0_12] : memref<1x1x8x128xf32, #tpu.memory_space<vmem>>, vector<1x1x8x128xf32>
    tpu.vector_store %arg4[%c0_9, %c0_10, %c0_11, %c0_12], %52 {strides = array<i32>} : memref<1x1x8x128xf32, #tpu.memory_space<vmem>>, vector<1x1x8x128xf32>,
    return
  }
  func.func @transform_0(%arg0: i32, %arg1: i32, %arg2: memref<1xf32, #tpu.memory_space<smem>>) -> (i32, i32, i32) {
    %c0_i32 = arith.constant 0 : i32
    %c0_i32_0 = arith.constant 0 : i32
    return %arg0, %c0_i32, %arg1 : i32, i32, i32
  }
  func.func @transform_1(%arg0: i32, %arg1: i32, %arg2: memref<1xf32, #tpu.memory_space<smem>>) -> (i32, i32, i32, i32) {
    %c0_i32 = arith.constant 0 : i32
    %c0_i32_0 = arith.constant 0 : i32
    %c0_i32_1 = arith.constant 0 : i32
    return %arg0, %arg1, %c0_i32, %c0_i32_0 : i32, i32, i32, i32
  }
}

</mosaic_0001>

<llo_original>
// kernel: prob_ohem_cross_entropy.2
$region0: #{prob_ohem_cross_entropy.2}
  #allocation0 [shape = 'u32[]', space=smem, size = 0x4, offset = 0x4, fixed_abs, tag = 'smem constant byte address 0x4 - core index']
  #allocation1 [shape = 'u32[144,128]{1,0:T(1,128)}', space=vmem, size = 0x12000, scoped, tag = 'internal scratch']
  %s0 = inlined_call_operand.vmem [shape: f32[2,5,256], index: 0, kind: input, shape index: {}]
  %s1 = inlined_call_operand.vmem [shape: s32[2,1,256], index: 1, kind: input, shape index: {}]
  %s2 = inlined_call_operand.vmem [shape: f32[2,1,256], index: 2, kind: output, shape index: {}]
  %s3 = sld [smem:[#allocation0]]
  $region41: #{prob_ohem_cross_entropy.2} parent=0
    _
  %s5 = ssub.s32 1, %s3
  %s6 = scalar_select 0, %s5, %s3
  loop: start=0, step=1, limit=4
  $region2: #{prob_ohem_cross_entropy.2} parent=0 // loop_pre_header
    _
  $region3: #{prob_ohem_cross_entropy.2} parent=0 // loop_header
    %s8 = sphi 0, %s12
    %p9 = scmp.ge.s32.totalorder %s8, 4
    %s15 = sphi 0, %s27
    %s16 = sphi 0, %s23
    %s17 = sphi 0, %s15
    %s18 = sphi 0, %s16
    %s19 = sphi 0, %s17
    %s20 = sphi 0, %s18
    %s32 = sphi 0, %s34
    %s35 = sphi 0, %s32
    %s36 = sphi 0, %s35
    %s52 = sphi 0, %s36
    %s60 = sphi 0, %s62
    %s63 = sphi 0, %s60
    %s64 = sphi 0, %s63
    %s80 = sphi 0, %s64
    %s88 = sphi 0, %s90
    %s91 = sphi 0, %s88
    %s92 = sphi 0, %s91
    %s108 = sphi 0, %s92
  $region4: #{prob_ohem_cross_entropy.2} parent=0 // loop_header_branch
    %11 = sbr.rel (%p9) target = $region8
  $region5: #{prob_ohem_cross_entropy.2} parent=0 // loop_body
    %s13 = ssub.s32 %s8, 1
    %s14 = ssub.s32 %s8, 2
    %s21 = sadd.s32 1, %s16
    %p22 = scmp.ge.s32.totalorder %s21, 1
    %s23 = scalar_select %p22, 0, %s21
    %s24 = sadd.s32 1, %s15
    %s25 = scalar_select %p22, %s24, %s15
    %p26 = scmp.ge.s32.totalorder %s25, 2
    %s27 = scalar_select %p26, 0, %s25
    %s28 = ssub.s32 %s15, %s27
    %s29 = ssub.s32 %s16, %s23
    %s30 = sor.u32 %s28, %s29
    %p31 = scmp.eq.s32.totalorder %s30, 0
    %s33 = sadd.s32 %s32, 1
    %s34 = scalar_select %p31, %s32, %s33
    %p37 = pneg %p31
    %p38 = scmp.eq.s32.totalorder %s8, 1
    %p39 = por %p37, %p38
    %p40 = scmp.ne.s32.totalorder %s32, %s35
    %p41 = scmp.eq.s32.totalorder %s8, 0
    %p42 = por %p40, %p41
    %p43 = scmp.ne.s32.totalorder %s32, %s35
    %p44 = scmp.eq.s32.totalorder %s13, 1
    %p45 = por %p43, %p44
    %p46 = scmp.ne.s32.totalorder %s35, %s36
    %p47 = scmp.eq.s32.totalorder %s13, 0
    %p48 = por %p46, %p47
    %p49 = scmp.ne.s32.totalorder %s35, %s36
    %p50 = scmp.eq.s32.totalorder %s14, 1
    %p51 = por %p49, %p50
    %p53 = scmp.ne.s32.totalorder %s36, %s52
    %p54 = scmp.eq.s32.totalorder %s14, 0
    %p55 = por %p53, %p54
    %s56 = ssub.s32 %s15, %s27
    %s57 = ssub.s32 %s16, %s23
    %s58 = sor.u32 %s56, %s57
    %p59 = scmp.eq.s32.totalorder %s58, 0
    %s61 = sadd.s32 %s60, 1
    %s62 = scalar_select %p59, %s60, %s61
    %p65 = pneg %p59
    %p66 = scmp.eq.s32.totalorder %s8, 1
    %p67 = por %p65, %p66
    %p68 = scmp.ne.s32.totalorder %s60, %s63
    %p69 = scmp.eq.s32.totalorder %s8, 0
    %p70 = por %p68, %p69
    %p71 = scmp.ne.s32.totalorder %s60, %s63
    %p72 = scmp.eq.s32.totalorder %s13, 1
    %p73 = por %p71, %p72
    %p74 = scmp.ne.s32.totalorder %s63, %s64
    %p75 = scmp.eq.s32.totalorder %s13, 0
    %p76 = por %p74, %p75
    %p77 = scmp.ne.s32.totalorder %s63, %s64
    %p78 = scmp.eq.s32.totalorder %s14, 1
    %p79 = por %p77, %p78
    %p81 = scmp.ne.s32.totalorder %s64, %s80
    %p82 = scmp.eq.s32.totalorder %s14, 0
    %p83 = por %p81, %p82
    %s84 = ssub.s32 %s15, %s27
    %s85 = ssub.s32 %s16, %s23
    %s86 = sor.u32 %s84, %s85
    %p87 = scmp.eq.s32.totalorder %s86, 0
    %s89 = sadd.s32 %s88, 1
    %s90 = scalar_select %p87, %s88, %s89
    %p93 = pneg %p87
    %p94 = scmp.eq.s32.totalorder %s8, 1
    %p95 = por %p93, %p94
    %p96 = scmp.ne.s32.totalorder %s88, %s91
    %p97 = scmp.eq.s32.totalorder %s8, 0
    %p98 = por %p96, %p97
    %p99 = scmp.ne.s32.totalorder %s88, %s91
    %p100 = scmp.eq.s32.totalorder %s13, 1
    %p101 = por %p99, %p100
    %p102 = scmp.ne.s32.totalorder %s91, %s92
    %p103 = scmp.eq.s32.totalorder %s13, 0
    %p104 = por %p102, %p103
    %p105 = scmp.ne.s32.totalorder %s91, %s92
    %p106 = scmp.eq.s32.totalorder %s14, 1
    %p107 = por %p105, %p106
    %p109 = scmp.ne.s32.totalorder %s92, %s108
    %p110 = scmp.eq.s32.totalorder %s14, 0
    %p111 = por %p109, %p110
    %p112 = scmp.le.s32.totalorder 1, %s8
    %p113 = scmp.lt.s32.totalorder %s8, 3
    %p114 = pnand %p112, %p113
    %p115 = pneg %p114
    // Predicated region
    $region9: #{prob_ohem_cross_entropy.2} parent=5 // pred_check
      _
    $region10: #{prob_ohem_cross_entropy.2} parent=5 // pred_check_branch
      %117 = sbr.rel (%p114) target = $region12
    $region11: #{prob_ohem_cross_entropy.2} parent=5 // pred_region
      %s118 = ssub.s32 %s8, 1
    $region12: #{prob_ohem_cross_entropy.2} parent=5 // pred_fallthru
      _
    %p119 = scmp.lt.s32.totalorder %s8, 2
    // Predicated region
    $region13: #{prob_ohem_cross_entropy.2} parent=5 // pred_check
      %p120 = pneg %p119
    $region14: #{prob_ohem_cross_entropy.2} parent=5 // pred_check_branch
      %122 = sbr.rel (%p120) target = $region16
    $region15: #{prob_ohem_cross_entropy.2} parent=5 // pred_region
      // Predicated region
      $region17: #{prob_ohem_cross_entropy.2} parent=15 // pred_check
        %p123 = pneg %p42
      $region18: #{prob_ohem_cross_entropy.2} parent=15 // pred_check_branch
        %125 = sbr.rel (%p123) target = $region20
      $region19: #{prob_ohem_cross_entropy.2} parent=15 // pred_region
        %s126 = smul.u32 2, %s16
        %p127 = scmp.lt.s32.totalorder %s15, 1
        %s128 = scalar_select %p127, %s15, 1
        %p129 = scmp.lt.s32.totalorder %s126, 1
        %s130 = scalar_select %p129, %s126, 1
        %s131 = smul.addr %s128, 2
        %s132 = sadd.s32 %s130, %s131
        %s133 = smul.addr %s132, 8
        %s134 = scalar_lea.vmem %s0, %s133
        %s135 = smul.u32 2, %s16
      $region20: #{prob_ohem_cross_entropy.2} parent=15 // pred_fallthru
        _
      // Predicated region
      $region21: #{prob_ohem_cross_entropy.2} parent=15 // pred_check
        %p136 = pneg %p70
      $region22: #{prob_ohem_cross_entropy.2} parent=15 // pred_check_branch
        %138 = sbr.rel (%p136) target = $region24
      $region23: #{prob_ohem_cross_entropy.2} parent=15 // pred_region
        %s139 = smul.u32 2, %s16
        %p140 = scmp.lt.s32.totalorder %s15, 1
        %s141 = scalar_select %p140, %s15, 1
        %p142 = scmp.lt.s32.totalorder %s139, 1
        %s143 = scalar_select %p142, %s139, 1
        %s144 = smul.addr %s141, 2
        %s145 = sadd.s32 %s143, %s144
        %s146 = scalar_lea.vmem %s1, %s145
        %s147 = smul.u32 2, %s16
      $region24: #{prob_ohem_cross_entropy.2} parent=15 // pred_fallthru
        _
    $region16: #{prob_ohem_cross_entropy.2} parent=5 // pred_fallthru
      _
    %p148 = scmp.le.s32.totalorder 1, %s8
    %p149 = scmp.lt.s32.totalorder %s8, 3
    %p150 = pnand %p148, %p149
    %p151 = pneg %p150
    // Predicated region
    $region25: #{prob_ohem_cross_entropy.2} parent=5 // pred_check
      _
    $region26: #{prob_ohem_cross_entropy.2} parent=5 // pred_check_branch
      %153 = sbr.rel (%p150) target = $region28
    $region27: #{prob_ohem_cross_entropy.2} parent=5 // pred_region
      %s154 = ssub.s32 %s8, 1
      %s155 = smul.u32 2, %s18
      %p156 = scmp.lt.s32.totalorder %s17, 1
      %s157 = scalar_select %p156, %s17, 1
      %p158 = scmp.lt.s32.totalorder %s155, 1
      %s159 = scalar_select %p158, %s155, 1
      %s160 = smul.addr %s157, 2
      %s161 = sadd.s32 %s159, %s160
      %s162 = smul.addr %s161, 8
      %s163 = scalar_lea.vmem %s0, %s162
      %p164 = pneg %p48
      %p165 = pneg %p45
      %s166 = smul.u32 2, %s18
      %p167 = scmp.lt.s32.totalorder %s17, 1
      %s168 = scalar_select %p167, %s17, 1
      %p169 = scmp.lt.s32.totalorder %s166, 1
      %s170 = scalar_select %p169, %s166, 1
      %s171 = smul.addr %s168, 2
      %s172 = sadd.s32 %s170, %s171
      %s173 = scalar_lea.vmem %s1, %s172
      %p174 = pneg %p76
      %p175 = pneg %p73
      %p176 = pneg %p104
      %p177 = pneg %p101
      %s178 = smul.u32 2, %s18
      %p179 = scmp.lt.s32.totalorder %s17, 1
      %s180 = scalar_select %p179, %s17, 1
      %p181 = scmp.lt.s32.totalorder %s178, 1
      %s182 = scalar_select %p181, %s178, 1
      %s183 = smul.addr %s180, 2
      %s184 = sadd.s32 %s182, %s183
      %s185 = scalar_lea.vmem %s2, %s184
      %s186 = smul.u32 2, %s18
      %p187 = scmp.lt.s32.totalorder %s17, 1
      %s188 = scalar_select %p187, %s17, 1
      %p189 = scmp.lt.s32.totalorder %s186, 1
      %s190 = scalar_select %p189, %s186, 1
      %s191 = smul.addr %s188, 2
      %s192 = sadd.s32 %s190, %s191
      %s193 = smul.addr %s192, 8
      %s194 = scalar_lea.vmem %s0, %s193
      %s195 = smul.u32 2, %s18
      %s196 = smul.u32 2, %s18
      %p197 = scmp.lt.s32.totalorder %s17, 1
      %s198 = scalar_select %p197, %s17, 1
      %p199 = scmp.lt.s32.totalorder %s196, 1
      %s200 = scalar_select %p199, %s196, 1
      %s201 = smul.addr %s198, 2
      %s202 = sadd.s32 %s200, %s201
      %s203 = scalar_lea.vmem %s1, %s202
      %s204 = smul.u32 2, %s18
      %s205 = smul.u32 2, %s18
      %p206 = scmp.lt.s32.totalorder %s17, 1
      %s207 = scalar_select %p206, %s17, 1
      %p208 = scmp.lt.s32.totalorder %s205, 1
      %s209 = scalar_select %p208, %s205, 1
      %s210 = smul.addr %s207, 2
      %s211 = sadd.s32 %s209, %s210
      %s212 = scalar_lea.vmem %s2, %s211
      %s213 = smul.u32 2, %s18
      %v214 = vld [vmem:[%s194] sm:$0x1f]
      %v215 = vld [vmem:[%s194 + $0x8] sm:$0x1f]
      %v216 = vld [vmem:[%s203] sm:$0x3]
      %vm217 = vcmp.ne.s32.totalorder %v216, 255
      %v218 = vsel %vm217, %v216, 0
      %vm219 = vcmask 1044480
      %v220 = vsel %vm219, %v214, -inf
      %v221 = vrot.slane %v220, 4
      %v222 = vmax.f32 %v220, %v221
      %v223 = vrot.slane %v222, 2
      %v224 = vmax.f32 %v222, %v223
      %v225 = vrot.slane %v224, 1
      %v226 = vmax.f32 %v224, %v225
      %v227 = vsel %vm219, %v215, -inf
      %v228 = vrot.slane %v227, 4
      %v229 = vmax.f32 %v227, %v228
      %v230 = vrot.slane %v229, 2
      %v231 = vmax.f32 %v229, %v230
      %v232 = vrot.slane %v231, 1
      %v233 = vmax.f32 %v231, %v232
      %v234 = vsub.f32 %v214, %v226
      %v235 = vsub.f32 %v215, %v233
      %v236 = vmul.f32 %v234, 1.442695
      %v237 = vpow.pop %v236
      %v238 = vmul.f32 %v235, 1.442695
      %v239 = vpow.pop %v238
      %v240 = vsel %vm219, %v237, 0.0
      %v241 = vrot.slane %v240, 4
      %v242 = vadd.f32 %v240, %v241
      %v243 = vrot.slane %v242, 2
      %v244 = vadd.f32 %v242, %v243
      %v245 = vrot.slane %v244, 1
      %v246 = vadd.f32 %v244, %v245
      %v247 = vsel %vm219, %v239, 0.0
      %v248 = vrot.slane %v247, 4
      %v249 = vadd.f32 %v247, %v248
      %v250 = vrot.slane %v249, 2
      %v251 = vadd.f32 %v249, %v250
      %v252 = vrot.slane %v251, 1
      %v253 = vadd.f32 %v251, %v252
      %v254 = vlaneseq
      %v255 = vshrl.u32 %v254, 7
      %v256 = vlaneseq
      %v257 = vshrl.u32 %v256, 7
      %v258 = vsub.s32 0, %v257
      %v259 = vrot.slane %v218, %v258
      %v260 = vlaneseq
      %v261 = vshrl.u32 %v260, 7
      %v262 = vsub.s32 1, %v261
      %v263 = vrot.slane %v218, %v262
      %vm264 = vcmp.eq.s32.totalorder %v255, %v259
      %vm265 = vcmp.eq.s32.totalorder %v255, %v263
      %v266 = vsel %vm264, %v234, 0.0
      %v267 = vsel %vm265, %v235, 0.0
      %v268 = vsel %vm219, %v266, 0.0
      %v269 = vrot.slane %v268, 4
      %v270 = vadd.f32 %v268, %v269
      %v271 = vrot.slane %v270, 2
      %v272 = vadd.f32 %v270, %v271
      %v273 = vrot.slane %v272, 1
      %v274 = vadd.f32 %v272, %v273
      %v275 = vsel %vm219, %v267, 0.0
      %v276 = vrot.slane %v275, 4
      %v277 = vadd.f32 %v275, %v276
      %v278 = vrot.slane %v277, 2
      %v279 = vadd.f32 %v277, %v278
      %v280 = vrot.slane %v279, 1
      %v281 = vadd.f32 %v279, %v280
      %v282 = vlog2.pop %v246
      %v283 = vmul.f32 %v282, 0.6931472
      %v284 = vlog2.pop %v253
      %v285 = vmul.f32 %v284, 0.6931472
      %v286 = vsub.f32 %v283, %v274
      %v287 = vsub.f32 %v285, %v281
      %v290 = vcombine.low %v286, %v287
      %v292 = vunpack.c.l.s4 1966171168
      %v293 = vunpack.c.0.s8 %v292
      %v294 = vlaneseq
      %v295 = vshrl.u32 %v294, 7
      %v296 = vsub.s32 %v293, %v295
      %v297 = vrot.slane %v290, %v296
      %v299 = vunpack.c.l.s4 1966171168
      %v300 = vunpack.c.0.s8 %v299
      %v301 = vlaneseq
      %v302 = vshrl.u32 %v301, 7
      %v303 = vsub.s32 %v300, %v302
      %v304 = vrot.slane %v297, %v303
      %v306 = vsel %vm217, %v304, -1.0
      %v307 = vlaneseq
      %vm308 = vcmp.ge.s32.totalorder %v307, 0
      %vm309 = vcmp.lt.s32.totalorder %v307, 256
      %vm310 = vmand %vm308, %vm309
      %311 = vst.msk [vmem:[%s212] sm:$0x3] %vm310, %v306
      %s312 = smul.u32 2, %s18
      %p313 = scmp.lt.s32.totalorder %s17, 1
      %s314 = scalar_select %p313, %s17, 1
      %p315 = scmp.lt.s32.totalorder %s312, 1
      %s316 = scalar_select %p315, %s312, 1
      %s317 = smul.addr %s314, 2
      %s318 = sadd.s32 %s316, %s317
      %s319 = scalar_lea.vmem %s2, %s318
      // Predicated region
      $region29: #{prob_ohem_cross_entropy.2} parent=27 // pred_check
        %p320 = pneg %p101
      $region30: #{prob_ohem_cross_entropy.2} parent=27 // pred_check_branch
        %322 = sbr.rel (%p320) target = $region32
      $region31: #{prob_ohem_cross_entropy.2} parent=27 // pred_region
        %s323 = smul.u32 2, %s18
      $region32: #{prob_ohem_cross_entropy.2} parent=27 // pred_fallthru
        _
    $region28: #{prob_ohem_cross_entropy.2} parent=5 // pred_fallthru
      _
    %p324 = scmp.le.s32.totalorder 2, %s8
    // Predicated region
    $region33: #{prob_ohem_cross_entropy.2} parent=5 // pred_check
      %p325 = pneg %p324
    $region34: #{prob_ohem_cross_entropy.2} parent=5 // pred_check_branch
      %327 = sbr.rel (%p325) target = $region36
    $region35: #{prob_ohem_cross_entropy.2} parent=5 // pred_region
      %s328 = ssub.s32 %s8, 2
      // Predicated region
      $region37: #{prob_ohem_cross_entropy.2} parent=35 // pred_check
        %p329 = pneg %p107
      $region38: #{prob_ohem_cross_entropy.2} parent=35 // pred_check_branch
        %331 = sbr.rel (%p329) target = $region40
      $region39: #{prob_ohem_cross_entropy.2} parent=35 // pred_region
        %s332 = smul.u32 2, %s20
        %p333 = scmp.lt.s32.totalorder %s19, 1
        %s334 = scalar_select %p333, %s19, 1
        %p335 = scmp.lt.s32.totalorder %s332, 1
        %s336 = scalar_select %p335, %s332, 1
        %s337 = smul.addr %s334, 2
        %s338 = sadd.s32 %s336, %s337
        %s339 = scalar_lea.vmem %s2, %s338
      $region40: #{prob_ohem_cross_entropy.2} parent=35 // pred_fallthru
        _
    $region36: #{prob_ohem_cross_entropy.2} parent=5 // pred_fallthru
      _
  $region6: #{prob_ohem_cross_entropy.2} parent=0 // loop_footer
    %s12 = sadd.s32 1, %s8
  $region7: #{prob_ohem_cross_entropy.2} parent=0 // loop_footer_branch
    %7 = sbr.rel target = $region3
  $region8: #{prob_ohem_cross_entropy.2} parent=0 // loop_exit
    _

// kernel: prob_ohem_cross_entropy.3
$region0: #{prob_ohem_cross_entropy.3}
  #allocation0 [shape = 'u32[]', space=smem, size = 0x4, offset = 0x4, fixed_abs, tag = 'smem constant byte address 0x4 - core index']
  #allocation1 [shape = 'u32[144,128]{1,0:T(1,128)}', space=vmem, size = 0x12000, scoped, tag = 'internal scratch']
  #allocation2 [shape = 's32[1]{0}', space=sflag, size = 0x4, scoped, tag = 'scoped memory for prob_ohem_cross_entropy.3']
  #allocation3 [shape = 'f32[1]{0:T(128)S(6)}', space=smem, size = 0x200, scoped, tag = 'prefetched SMEM operand 0']
  %s0 = inlined_call_operand.<no memory space> [shape: f32[1], index: 0, kind: input, shape index: {}]
  %s1 = inlined_call_operand.vmem [shape: f32[2,1,256], index: 1, kind: input, shape index: {}]
  %s2 = inlined_call_operand.vmem [shape: f32[2,1,8,128], index: 2, kind: output, shape index: {}]
  %s3 = sld [smem:[#allocation0]]
  $region37: #{prob_ohem_cross_entropy.3} parent=0
    _
  %s5 = ssub.s32 1, %s3
  %s6 = scalar_select 0, %s5, %s3
  %7 = sst [smem:[#allocation3]] %s0
  loop: start=0, step=1, limit=4
  $region2: #{prob_ohem_cross_entropy.3} parent=0 // loop_pre_header
    _
  $region3: #{prob_ohem_cross_entropy.3} parent=0 // loop_header
    %s9 = sphi 0, %s13
    %p10 = scmp.ge.s32.totalorder %s9, 4
    %s16 = sphi 0, %s28
    %s17 = sphi 0, %s24
    %s18 = sphi 0, %s16
    %s19 = sphi 0, %s17
    %s20 = sphi 0, %s18
    %s21 = sphi 0, %s19
    %s33 = sphi 0, %s35
    %s36 = sphi 0, %s33
    %s37 = sphi 0, %s36
    %s53 = sphi 0, %s37
    %s61 = sphi 0, %s63
    %s64 = sphi 0, %s61
    %s65 = sphi 0, %s64
    %s81 = sphi 0, %s65
  $region4: #{prob_ohem_cross_entropy.3} parent=0 // loop_header_branch
    %12 = sbr.rel (%p10) target = $region8
  $region5: #{prob_ohem_cross_entropy.3} parent=0 // loop_body
    %s14 = ssub.s32 %s9, 1
    %s15 = ssub.s32 %s9, 2
    %s22 = sadd.s32 1, %s17
    %p23 = scmp.ge.s32.totalorder %s22, 1
    %s24 = scalar_select %p23, 0, %s22
    %s25 = sadd.s32 1, %s16
    %s26 = scalar_select %p23, %s25, %s16
    %p27 = scmp.ge.s32.totalorder %s26, 2
    %s28 = scalar_select %p27, 0, %s26
    %s29 = ssub.s32 %s16, %s28
    %s30 = ssub.s32 %s17, %s24
    %s31 = sor.u32 %s29, %s30
    %p32 = scmp.eq.s32.totalorder %s31, 0
    %s34 = sadd.s32 %s33, 1
    %s35 = scalar_select %p32, %s33, %s34
    %p38 = pneg %p32
    %p39 = scmp.eq.s32.totalorder %s9, 1
    %p40 = por %p38, %p39
    %p41 = scmp.ne.s32.totalorder %s33, %s36
    %p42 = scmp.eq.s32.totalorder %s9, 0
    %p43 = por %p41, %p42
    %p44 = scmp.ne.s32.totalorder %s33, %s36
    %p45 = scmp.eq.s32.totalorder %s14, 1
    %p46 = por %p44, %p45
    %p47 = scmp.ne.s32.totalorder %s36, %s37
    %p48 = scmp.eq.s32.totalorder %s14, 0
    %p49 = por %p47, %p48
    %p50 = scmp.ne.s32.totalorder %s36, %s37
    %p51 = scmp.eq.s32.totalorder %s15, 1
    %p52 = por %p50, %p51
    %p54 = scmp.ne.s32.totalorder %s37, %s53
    %p55 = scmp.eq.s32.totalorder %s15, 0
    %p56 = por %p54, %p55
    %s57 = ssub.s32 %s16, %s28
    %s58 = ssub.s32 %s17, %s24
    %s59 = sor.u32 %s57, %s58
    %p60 = scmp.eq.s32.totalorder %s59, 0
    %s62 = sadd.s32 %s61, 1
    %s63 = scalar_select %p60, %s61, %s62
    %p66 = pneg %p60
    %p67 = scmp.eq.s32.totalorder %s9, 1
    %p68 = por %p66, %p67
    %p69 = scmp.ne.s32.totalorder %s61, %s64
    %p70 = scmp.eq.s32.totalorder %s9, 0
    %p71 = por %p69, %p70
    %p72 = scmp.ne.s32.totalorder %s61, %s64
    %p73 = scmp.eq.s32.totalorder %s14, 1
    %p74 = por %p72, %p73
    %p75 = scmp.ne.s32.totalorder %s64, %s65
    %p76 = scmp.eq.s32.totalorder %s14, 0
    %p77 = por %p75, %p76
    %p78 = scmp.ne.s32.totalorder %s64, %s65
    %p79 = scmp.eq.s32.totalorder %s15, 1
    %p80 = por %p78, %p79
    %p82 = scmp.ne.s32.totalorder %s65, %s81
    %p83 = scmp.eq.s32.totalorder %s15, 0
    %p84 = por %p82, %p83
    %p85 = scmp.le.s32.totalorder 1, %s9
    %p86 = scmp.lt.s32.totalorder %s9, 3
    %p87 = pnand %p85, %p86
    %p88 = pneg %p87
    // Predicated region
    $region9: #{prob_ohem_cross_entropy.3} parent=5 // pred_check
      _
    $region10: #{prob_ohem_cross_entropy.3} parent=5 // pred_check_branch
      %90 = sbr.rel (%p87) target = $region12
    $region11: #{prob_ohem_cross_entropy.3} parent=5 // pred_region
      %s91 = ssub.s32 %s9, 1
    $region12: #{prob_ohem_cross_entropy.3} parent=5 // pred_fallthru
      _
    %p92 = scmp.lt.s32.totalorder %s9, 2
    // Predicated region
    $region13: #{prob_ohem_cross_entropy.3} parent=5 // pred_check
      %p93 = pneg %p92
    $region14: #{prob_ohem_cross_entropy.3} parent=5 // pred_check_branch
      %95 = sbr.rel (%p93) target = $region16
    $region15: #{prob_ohem_cross_entropy.3} parent=5 // pred_region
      // Predicated region
      $region17: #{prob_ohem_cross_entropy.3} parent=15 // pred_check
        %p96 = pneg %p43
      $region18: #{prob_ohem_cross_entropy.3} parent=15 // pred_check_branch
        %98 = sbr.rel (%p96) target = $region20
      $region19: #{prob_ohem_cross_entropy.3} parent=15 // pred_region
        %s99 = smul.u32 2, %s17
        %p100 = scmp.lt.s32.totalorder %s16, 1
        %s101 = scalar_select %p100, %s16, 1
        %p102 = scmp.lt.s32.totalorder %s99, 1
        %s103 = scalar_select %p102, %s99, 1
        %s104 = smul.addr %s101, 2
        %s105 = sadd.s32 %s103, %s104
        %s106 = scalar_lea.vmem %s1, %s105
        %s107 = smul.u32 2, %s17
      $region20: #{prob_ohem_cross_entropy.3} parent=15 // pred_fallthru
        _
    $region16: #{prob_ohem_cross_entropy.3} parent=5 // pred_fallthru
      _
    %p108 = scmp.le.s32.totalorder 1, %s9
    %p109 = scmp.lt.s32.totalorder %s9, 3
    %p110 = pnand %p108, %p109
    %p111 = pneg %p110
    // Predicated region
    $region21: #{prob_ohem_cross_entropy.3} parent=5 // pred_check
      _
    $region22: #{prob_ohem_cross_entropy.3} parent=5 // pred_check_branch
      %113 = sbr.rel (%p110) target = $region24
    $region23: #{prob_ohem_cross_entropy.3} parent=5 // pred_region
      %s114 = ssub.s32 %s9, 1
      %s115 = smul.u32 2, %s19
      %p116 = scmp.lt.s32.totalorder %s18, 1
      %s117 = scalar_select %p116, %s18, 1
      %p118 = scmp.lt.s32.totalorder %s115, 1
      %s119 = scalar_select %p118, %s115, 1
      %s120 = smul.addr %s117, 2
      %s121 = sadd.s32 %s119, %s120
      %s122 = scalar_lea.vmem %s1, %s121
      %p123 = pneg %p49
      %p124 = pneg %p46
      %p125 = pneg %p77
      %p126 = pneg %p74
      %p127 = scmp.lt.s32.totalorder %s18, 1
      %s128 = scalar_select %p127, %s18, 1
      %p129 = scmp.lt.s32.totalorder %s19, 0
      %s130 = scalar_select %p129, %s19, 0
      %s131 = sadd.s32 %s130, %s128
      %s132 = smul.addr %s131, 8
      %s133 = scalar_lea.vmem %s2, %s132
      %s134 = smul.u32 2, %s19
      %p135 = scmp.lt.s32.totalorder %s18, 1
      %s136 = scalar_select %p135, %s18, 1
      %p137 = scmp.lt.s32.totalorder %s134, 1
      %s138 = scalar_select %p137, %s134, 1
      %s139 = smul.addr %s136, 2
      %s140 = sadd.s32 %s138, %s139
      %s141 = scalar_lea.vmem %s1, %s140
      %s142 = smul.u32 2, %s19
      %p143 = scmp.lt.s32.totalorder %s18, 1
      %s144 = scalar_select %p143, %s18, 1
      %p145 = scmp.lt.s32.totalorder %s19, 0
      %s146 = scalar_select %p145, %s19, 0
      %s147 = sadd.s32 %s146, %s144
      %s148 = smul.addr %s147, 8
      %s149 = scalar_lea.vmem %s2, %s148
      %s150 = sld [smem:[#allocation3]]
      %v151 = vld [vmem:[%s141] sm:$0x3]
      %vm152 = vcmp.ge.f32.partialorder %v151, 0.0
      %v153 = vsel %vm152, 1, 0
      %v154 = vcvt.s32.f32 %v153
      %v155 = vstv %s150
      %vm156 = vcmp.ge.f32.partialorder %v151, %v155
      %v157 = vsel %vm156, 1, 0
      %v158 = vcvt.s32.f32 %v157
      %v159 = vmul.f32 %v151, %v158
      %v161 = vlaneseq
      %v162 = vshrl.u32 %v161, 7
      %v163 = vsub.s32 0, %v162
      %v164 = vrot.slane %v159, %v163
      %v165 = vlaneseq
      %v166 = vshrl.u32 %v165, 7
      %v167 = vsub.s32 1, %v166
      %v168 = vrot.slane %v159, %v167
      %vm171 = vcmask 1040384
      %v172 = vsel %vm171, %v164, 0.0
      %v173 = vsel %vm171, %v168, 0.0
      %v174 = vadd.f32 %v172, %v173
      %175 = vadd.xlane.f32.xlu0 %v174
      %v176 = vpop.xlane.xlu0 %175
      %v177 = vrot.slane %v176, 4
      %v178 = vadd.f32 %v176, %v177
      %v179 = vrot.slane %v178, 2
      %v180 = vadd.f32 %v178, %v179
      %v181 = vrot.slane %v180, 1
      %v182 = vadd.f32 %v180, %v181
      %s183 = vtos %v182
      %v185 = vlaneseq
      %v186 = vshrl.u32 %v185, 7
      %v187 = vsub.s32 0, %v186
      %v188 = vrot.slane %v158, %v187
      %v189 = vlaneseq
      %v190 = vshrl.u32 %v189, 7
      %v191 = vsub.s32 1, %v190
      %v192 = vrot.slane %v158, %v191
      %v195 = vsel %vm171, %v188, 0.0
      %v196 = vsel %vm171, %v192, 0.0
      %v197 = vadd.f32 %v195, %v196
      %198 = vadd.xlane.f32.xlu0 %v197
      %v199 = vpop.xlane.xlu0 %198
      %v200 = vrot.slane %v199, 4
      %v201 = vadd.f32 %v199, %v200
      %v202 = vrot.slane %v201, 2
      %v203 = vadd.f32 %v201, %v202
      %v204 = vrot.slane %v203, 1
      %v205 = vadd.f32 %v203, %v204
      %s206 = vtos %v205
      %v207 = vmul.f32 %v151, %v154
      %v209 = vlaneseq
      %v210 = vshrl.u32 %v209, 7
      %v211 = vsub.s32 0, %v210
      %v212 = vrot.slane %v207, %v211
      %v213 = vlaneseq
      %v214 = vshrl.u32 %v213, 7
      %v215 = vsub.s32 1, %v214
      %v216 = vrot.slane %v207, %v215
      %v219 = vsel %vm171, %v212, 0.0
      %v220 = vsel %vm171, %v216, 0.0
      %v221 = vadd.f32 %v219, %v220
      %222 = vadd.xlane.f32.xlu0 %v221
      %v223 = vpop.xlane.xlu0 %222
      %v224 = vrot.slane %v223, 4
      %v225 = vadd.f32 %v223, %v224
      %v226 = vrot.slane %v225, 2
      %v227 = vadd.f32 %v225, %v226
      %v228 = vrot.slane %v227, 1
      %v229 = vadd.f32 %v227, %v228
      %s230 = vtos %v229
      %v232 = vlaneseq
      %v233 = vshrl.u32 %v232, 7
      %v234 = vsub.s32 0, %v233
      %v235 = vrot.slane %v154, %v234
      %v236 = vlaneseq
      %v237 = vshrl.u32 %v236, 7
      %v238 = vsub.s32 1, %v237
      %v239 = vrot.slane %v154, %v238
      %v242 = vsel %vm171, %v235, 0.0
      %v243 = vsel %vm171, %v239, 0.0
      %v244 = vadd.f32 %v242, %v243
      %245 = vadd.xlane.f32.xlu0 %v244
      %v246 = vpop.xlane.xlu0 %245
      %v247 = vrot.slane %v246, 4
      %v248 = vadd.f32 %v246, %v247
      %v249 = vrot.slane %v248, 2
      %v250 = vadd.f32 %v248, %v249
      %v251 = vrot.slane %v250, 1
      %v252 = vadd.f32 %v250, %v251
      %s253 = vtos %v252
      %v254 = vlaneseq
      %v255 = vshrl.u32 %v254, 7
      %v256 = vlaneseq
      %v257 = vand.u32 %v256, 127
      %vm258 = vcmp.eq.s32.totalorder %v255, 0
      %vm259 = vcmp.eq.s32.totalorder %v257, 0
      %vm260 = vmand %vm258, %vm259
      %vm261 = vcmp.eq.s32.totalorder %v257, 1
      %vm262 = vmand %vm258, %vm261
      %vm263 = vcmp.eq.s32.totalorder %v257, 2
      %vm264 = vmand %vm258, %vm263
      %vm265 = vcmp.eq.s32.totalorder %v257, 3
      %vm266 = vmand %vm258, %vm265
      %v267 = vstv %s253
      %v268 = vsel %vm266, %v267, 0.0
      %v269 = vstv %s230
      %v270 = vsel %vm264, %v269, %v268
      %v271 = vstv %s206
      %v272 = vsel %vm262, %v271, %v270
      %v273 = vstv %s183
      %v274 = vsel %vm260, %v273, %v272
      %275 = vst [vmem:[%s149] sm:$0xff] %v274
      %p276 = scmp.lt.s32.totalorder %s18, 1
      %s277 = scalar_select %p276, %s18, 1
      %p278 = scmp.lt.s32.totalorder %s19, 0
      %s279 = scalar_select %p278, %s19, 0
      %s280 = sadd.s32 %s279, %s277
      %s281 = smul.addr %s280, 8
      %s282 = scalar_lea.vmem %s2, %s281
      // Predicated region
      $region25: #{prob_ohem_cross_entropy.3} parent=23 // pred_check
        %p283 = pneg %p74
      $region26: #{prob_ohem_cross_entropy.3} parent=23 // pred_check_branch
        %285 = sbr.rel (%p283) target = $region28
      $region27: #{prob_ohem_cross_entropy.3} parent=23 // pred_region
        _
      $region28: #{prob_ohem_cross_entropy.3} parent=23 // pred_fallthru
        _
    $region24: #{prob_ohem_cross_entropy.3} parent=5 // pred_fallthru
      _
    %p286 = scmp.le.s32.totalorder 2, %s9
    // Predicated region
    $region29: #{prob_ohem_cross_entropy.3} parent=5 // pred_check
      %p287 = pneg %p286
    $region30: #{prob_ohem_cross_entropy.3} parent=5 // pred_check_branch
      %289 = sbr.rel (%p287) target = $region32
    $region31: #{prob_ohem_cross_entropy.3} parent=5 // pred_region
      %s290 = ssub.s32 %s9, 2
      // Predicated region
      $region33: #{prob_ohem_cross_entropy.3} parent=31 // pred_check
        %p291 = pneg %p80
      $region34: #{prob_ohem_cross_entropy.3} parent=31 // pred_check_branch
        %293 = sbr.rel (%p291) target = $region36
      $region35: #{prob_ohem_cross_entropy.3} parent=31 // pred_region
        %p294 = scmp.lt.s32.totalorder %s20, 1
        %s295 = scalar_select %p294, %s20, 1
        %p296 = scmp.lt.s32.totalorder %s21, 0
        %s297 = scalar_select %p296, %s21, 0
        %s298 = sadd.s32 %s297, %s295
        %s299 = smul.addr %s298, 8
        %s300 = scalar_lea.vmem %s2, %s299
      $region36: #{prob_ohem_cross_entropy.3} parent=31 // pred_fallthru
        _
    $region32: #{prob_ohem_cross_entropy.3} parent=5 // pred_fallthru
      _
  $region6: #{prob_ohem_cross_entropy.3} parent=0 // loop_footer
    %s13 = sadd.s32 1, %s9
  $region7: #{prob_ohem_cross_entropy.3} parent=0 // loop_footer_branch
    %8 = sbr.rel target = $region3
  $region8: #{prob_ohem_cross_entropy.3} parent=0 // loop_exit
    _

</llo_original>
